<compile_context>
chip_gen: v7x
topology: tpu7x:2x2x1
jax: 0.10.0
libtpu: 0.0.40
codegen_flags: <defaults>
</compile_context>

<pallas_src>
import functools

import jax
import jax.numpy as jnp
from jax import lax
from jax.experimental import pallas as pl
from jax.experimental.pallas import tpu as pltpu


def _multi_order_kernel(g_ref, out_ref, *, order: int, use_bf16_matmul: bool):
    """One grid step == one graph.

    g_ref:   (N, N) f32 VMEM tile (the graph, resident for this step)
    out_ref: (order, N, N) f32 VMEM tile; slice [k-1] gets (g^k) * (1 - eye).
    """
    g = g_ref[...]                                   # (N, N) f32
    n = g_ref.shape[-1]

    # Off-diagonal mask, computed ONCE per graph (not per power).
    row = lax.broadcasted_iota(jnp.int32, (n, n), 0)
    col = lax.broadcasted_iota(jnp.int32, (n, n), 1)
    off_diag = row != col

    g_rhs = g.astype(jnp.bfloat16) if use_bf16_matmul else g

    # Order 1: the graph itself, diagonal zeroed.
    acc = g
    out_ref[0] = jnp.where(off_diag, acc, 0.0).astype(out_ref.dtype)

    # Orders 2..order: chain UNMASKED matmuls on the MXU (matches reference),
    # masking only the emitted result.  `order` is a small static int, so this
    # unrolls and the LLO scheduler can overlap power-k stores with power-k+1
    # matmuls.
    for k in range(1, order):
        lhs = acc.astype(jnp.bfloat16) if use_bf16_matmul else acc
        acc = jnp.dot(lhs, g_rhs, preferred_element_type=jnp.float32)
        out_ref[k] = jnp.where(off_diag, acc, 0.0).astype(out_ref.dtype)


def multi_order_batched(graphs: jax.Array, order: int, *,
                        use_bf16_matmul: bool = False) -> jax.Array:
    """Compute masked powers for a batch of graphs.

    graphs: (B, N, N) or (N, N) array.
    Returns (B, order, N, N) float32 where out[b, k-1] == (g_b^k) * (1 - eye(N)).
    """
    graphs = jnp.asarray(graphs, dtype=jnp.float32)
    if graphs.ndim == 2:
        graphs = graphs[None]
    b, n, m = graphs.shape
    assert n == m, "adjacency matrices must be square"
    assert order >= 1

    # Per-grid-step resident VMEM: double-buffered input graph + double-buffered
    # (order, N, N) output block.
    per_step_bytes = (2 + 2 * order) * n * n * 4
    vmem_limit = int(min(max(3 * per_step_bytes, 16 << 20), 64 << 20))

    kernel = functools.partial(
        _multi_order_kernel, order=order, use_bf16_matmul=use_bf16_matmul
    )

    out = pl.pallas_call(
        kernel,
        out_shape=jax.ShapeDtypeStruct((b, order, n, n), jnp.float32),
        grid_spec=pltpu.PrefetchScalarGridSpec(
            num_scalar_prefetch=0,
            grid=(b,),
            in_specs=[
                # Batch dim squeezed away; kernel sees a (N, N) graph tile.
                pl.BlockSpec((None, n, n), lambda i: (i, 0, 0)),
            ],
            out_specs=pl.BlockSpec((None, order, n, n), lambda i: (i, 0, 0, 0)),
        ),
        compiler_params=pltpu.CompilerParams(
            # Graphs are independent -> shard the batch axis across TensorCores
            # (2x on v7x megacore).  No sequential grid axis remains.
            dimension_semantics=("parallel",),
            vmem_limit_bytes=vmem_limit,
        ),
        cost_estimate=pl.CostEstimate(
            flops=2 * b * max(order - 1, 0) * n ** 3,
            bytes_accessed=b * n * n * 4 * (1 + order),
            transcendentals=0,
        ),
    )(graphs)
    return out


class MultiOrderPallas:
    """JAX/Pallas equivalent of the PyTorch MultiOrder module.

    __call__ returns the fused (B, order, N, N) slab (slice [b, k-1] equals the
    PyTorch result adj[b]^(k) * (1 - eye)).  Use `forward_lists` for the exact
    nested-list structure of the original module.
    """

    def __init__(self, order: int = 2, use_bf16_matmul: bool = False):
        self.order = order
        self.use_bf16_matmul = use_bf16_matmul

    def __call__(self, adj):
        graphs = [jnp.asarray(g, dtype=jnp.float32) for g in adj]
        if len(graphs) == 0:
            return jnp.zeros((0, self.order, 0, 0), jnp.float32)
        shapes = {g.shape for g in graphs}
        if len(shapes) == 1:
            stacked = jnp.stack(graphs, axis=0)          # (B, N, N)
            return multi_order_batched(
                stacked, self.order, use_bf16_matmul=self.use_bf16_matmul
            )
        # Mixed-size fallback: one call per distinct graph (rare path).
        return [
            multi_order_batched(g, self.order,
                                use_bf16_matmul=self.use_bf16_matmul)[0]
            for g in graphs
        ]

    def forward_lists(self, adj):
        """Exact PyTorch-style output: list (per graph) of list (per order)."""
        out = self(adj)
        if isinstance(out, list):
            return [[s[k] for k in range(self.order)] for s in out]
        return [[out[b, k] for k in range(self.order)] for b in range(out.shape[0])]


def _reference_multi_order(adj, order):
    """Pure-JAX reference mirroring the PyTorch code, for validation."""
    all_res = []
    for g in adj:
        n = g.shape[0]
        mask = 1.0 - jnp.eye(n, dtype=g.dtype)
        ordered = []
        k_1 = g
        ordered.append(k_1 * mask)
        for _ in range(2, order + 1):
            k_1 = jnp.matmul(k_1, g)
            ordered.append(k_1 * mask)
        all_res.append(ordered)
    return all_res


if __name__ == "__main__":
    key = jax.random.PRNGKey(0)
    order = 3
    n = 16
    num_graphs = 2

    keys = jax.random.split(key, num_graphs)
    adj = [jax.random.uniform(k, (n, n), dtype=jnp.float32) for k in keys]

    model = MultiOrderPallas(order=order)
    out = model(adj)                 # (B, order, N, N) slab, single pallas_call
    out = jax.block_until_ready(out)

    # Validate against pure-JAX reference (PyTorch-equivalent semantics).
    ref = _reference_multi_order(adj, order)
    ok = True
    for b in range(num_graphs):
        for k in range(order):
            if not jnp.allclose(out[b, k], ref[b][k], atol=1e-4, rtol=1e-4):
                ok = False

    if ok:
        print("KERNEL_OK")
    else:
        print("KERNEL_MISMATCH")
</pallas_src>

<mosaic_0001>
module attributes {stable_mosaic.version = 11 : i64} {
  func.func @_multi_order_kernel(%arg0: i32, %arg1: memref<1x16x16xf32, #tpu.memory_space<vmem>>, %arg2: memref<1x3x16x16xf32, #tpu.memory_space<vmem>>) attributes {dimension_semantics = [#tpu.dimension_semantics<parallel>], iteration_bounds = array<i64: 2>, scalar_prefetch = 0 : i64, scratch_operands = 0 : i64, tpu.core_type = #tpu.core_type<tc>, window_params = [{transform_indices = @transform_0, window_bounds = array<i64: 1, 16, 16>}, {transform_indices = @transform_1, window_bounds = array<i64: 1, 3, 16, 16>}]} {
    %c0 = arith.constant 0 : index
    %c0_0 = arith.constant 0 : index
    %c0_1 = arith.constant 0 : index
    %0 = vector.load %arg1[%c0, %c0_0, %c0_1] : memref<1x16x16xf32, #tpu.memory_space<vmem>>, vector<1x16x16xf32>
    %1 = vector.shape_cast %0 : vector<1x16x16xf32> to vector<16x16xf32>
    %2 = tpu.iota {dimensions = array<i32: 0>} : vector<16x16xi32>
    %3 = tpu.iota {dimensions = array<i32: 1>} : vector<16x16xi32>
    %4 = arith.cmpi ne, %2, %3 : vector<16x16xi32>
    %cst = arith.constant 0.000000e+00 : f32
    %5 = vector.broadcast %cst : f32 to vector<16x16xf32>
    %6 = arith.select %4, %1, %5 : vector<16x16xi1>, vector<16x16xf32>
    %c0_2 = arith.constant 0 : index
    %c0_3 = arith.constant 0 : index
    %c0_4 = arith.constant 0 : index
    %c0_5 = arith.constant 0 : index
    %7 = vector.load %arg2[%c0_2, %c0_3, %c0_4, %c0_5] : memref<1x3x16x16xf32, #tpu.memory_space<vmem>>, vector<1x1x16x16xf32>
    %8 = vector.shape_cast %7 : vector<1x1x16x16xf32> to vector<16x16xf32>
    %9 = vector.shape_cast %6 : vector<16x16xf32> to vector<1x1x16x16xf32>
    tpu.vector_store %arg2[%c0_2, %c0_3, %c0_4, %c0_5], %9 {strides = array<i32>} : memref<1x3x16x16xf32, #tpu.memory_space<vmem>>, vector<1x1x16x16xf32>,
    %cst_6 = arith.constant dense<0.000000e+00> : vector<16x16xf32>
    %10 = tpu.matmul %1, %1, %cst_6 {dimension_numbers = #tpu.dot_dimension_numbers<[1], [0], [0], [1], [0, 0, 1, 1], [], []>} : vector<16x16xf32>, vector<16x16xf32>, vector<16x16xf32> -> vector<16x16xf32>
    %cst_7 = arith.constant 0.000000e+00 : f32
    %11 = vector.broadcast %cst_7 : f32 to vector<16x16xf32>
    %12 = arith.select %4, %10, %11 : vector<16x16xi1>, vector<16x16xf32>
    %c0_8 = arith.constant 0 : index
    %c1 = arith.constant 1 : index
    %c0_9 = arith.constant 0 : index
    %c0_10 = arith.constant 0 : index
    %13 = vector.load %arg2[%c0_8, %c1, %c0_9, %c0_10] : memref<1x3x16x16xf32, #tpu.memory_space<vmem>>, vector<1x1x16x16xf32>
    %14 = vector.shape_cast %13 : vector<1x1x16x16xf32> to vector<16x16xf32>
    %15 = vector.shape_cast %12 : vector<16x16xf32> to vector<1x1x16x16xf32>
    tpu.vector_store %arg2[%c0_8, %c1, %c0_9, %c0_10], %15 {strides = array<i32>} : memref<1x3x16x16xf32, #tpu.memory_space<vmem>>, vector<1x1x16x16xf32>,
    %cst_11 = arith.constant dense<0.000000e+00> : vector<16x16xf32>
    %16 = tpu.matmul %10, %1, %cst_11 {dimension_numbers = #tpu.dot_dimension_numbers<[1], [0], [0], [1], [0, 0, 1, 1], [], []>} : vector<16x16xf32>, vector<16x16xf32>, vector<16x16xf32> -> vector<16x16xf32>
    %cst_12 = arith.constant 0.000000e+00 : f32
    %17 = vector.broadcast %cst_12 : f32 to vector<16x16xf32>
    %18 = arith.select %4, %16, %17 : vector<16x16xi1>, vector<16x16xf32>
    %c0_13 = arith.constant 0 : index
    %c2 = arith.constant 2 : index
    %c0_14 = arith.constant 0 : index
    %c0_15 = arith.constant 0 : index
    %19 = vector.load %arg2[%c0_13, %c2, %c0_14, %c0_15] : memref<1x3x16x16xf32, #tpu.memory_space<vmem>>, vector<1x1x16x16xf32>
    %20 = vector.shape_cast %19 : vector<1x1x16x16xf32> to vector<16x16xf32>
    %21 = vector.shape_cast %18 : vector<16x16xf32> to vector<1x1x16x16xf32>
    tpu.vector_store %arg2[%c0_13, %c2, %c0_14, %c0_15], %21 {strides = array<i32>} : memref<1x3x16x16xf32, #tpu.memory_space<vmem>>, vector<1x1x16x16xf32>,
    return
  }
  func.func @transform_0(%arg0: i32) -> (i32, i32, i32) {
    %c0_i32 = arith.constant 0 : i32
    %c0_i32_0 = arith.constant 0 : i32
    %c0_i32_1 = arith.constant 0 : i32
    return %arg0, %c0_i32, %c0_i32_0 : i32, i32, i32
  }
  func.func @transform_1(%arg0: i32) -> (i32, i32, i32, i32) {
    %c0_i32 = arith.constant 0 : i32
    %c0_i32_0 = arith.constant 0 : i32
    %c0_i32_1 = arith.constant 0 : i32
    %c0_i32_2 = arith.constant 0 : i32
    return %arg0, %c0_i32, %c0_i32_0, %c0_i32_1 : i32, i32, i32, i32
  }
}

</mosaic_0001>

<llo_original>
// kernel: tpu_custom_call.1
$region0: #{tpu_custom_call.1}
  #allocation0 [shape = 'u32[]', space=smem, size = 0x4, offset = 0x4, fixed_abs, tag = 'smem constant byte address 0x4 - core index']
  #allocation1 [shape = 'u32[144,128]{1,0:T(1,128)}', space=vmem, size = 0x12000, scoped, tag = 'internal scratch']
  %s0 = inlined_call_operand.hbm [shape: f32[2,16,16], index: 0, kind: input, shape index: {}]
  %s1 = inlined_call_operand.hbm [shape: f32[2,3,16,16], index: 1, kind: output, shape index: {}]
  %s2 = sld [smem:[#allocation0]]
  $region41: #{tpu_custom_call.1} parent=0
    _
  %s4 = ssub.s32 1, %s2
  %s5 = scalar_select 0, %s4, %s2
  $region1: #{tpu_custom_call.1} parent=0
    #allocation2 [shape = 'u8[16384]{0}', space=vmem, size = 0x4000, scoped, tag = 'input window, operand 0']
    #allocation3 [shape = 's32[2]{0}', space=sflag, size = 0x8, scoped, tag = 'scoped memory for tpu_custom_call.1']
    #allocation4 [shape = 's32[2]{0}', space=sflag, size = 0x8, scoped, tag = 'scoped memory for tpu_custom_call.1']
    #allocation5 [shape = 'u8[49152]{0}', space=vmem, size = 0xc000, scoped, tag = 'output window, operand 0']
    %6 = vsyncpa [#allocation3], 0
    %s7 = scalar_lea.sflag [#allocation3], 1
    %8 = vsyncpa %s7, 0
    %9 = vsyncpa [#allocation4], 0
    %s10 = scalar_lea.sflag [#allocation4], 1
    %11 = vsyncpa %s10, 0
    loop: start=0, step=1, limit=4
    $region2: #{tpu_custom_call.1} parent=1 // loop_pre_header
      _
    $region3: #{tpu_custom_call.1} parent=1 // loop_header
      %s13 = sphi 0, %s17
      %p14 = scmp.ge.s32.totalorder %s13, 4
      %s23 = sphi 0, %s25
      %s26 = sphi 0, %s23
      %s27 = sphi 0, %s26
      %s43 = sphi 0, %s27
      %s49 = sphi 0, %s51
      %s52 = sphi 0, %s49
      %s53 = sphi 0, %s52
      %s69 = sphi 0, %s53
    $region4: #{tpu_custom_call.1} parent=1 // loop_header_branch
      %16 = sbr.rel (%p14) target = $region8
    $region5: #{tpu_custom_call.1} parent=1 // loop_body
      %s18 = ssub.s32 %s13, 1
      %s19 = ssub.s32 %s13, 2
      %s20 = sadd.s32 %s13, 1
      %s21 = ssub.s32 %s13, %s20
      %p22 = scmp.eq.s32.totalorder %s21, 0
      %s24 = sadd.s32 %s23, 1
      %s25 = scalar_select %p22, %s23, %s24
      %p28 = pneg %p22
      %p29 = scmp.eq.s32.totalorder %s13, 1
      %p30 = por %p28, %p29
      %p31 = scmp.ne.s32.totalorder %s23, %s26
      %p32 = scmp.eq.s32.totalorder %s13, 0
      %p33 = por %p31, %p32
      %p34 = scmp.ne.s32.totalorder %s23, %s26
      %p35 = scmp.eq.s32.totalorder %s18, 1
      %p36 = por %p34, %p35
      %p37 = scmp.ne.s32.totalorder %s26, %s27
      %p38 = scmp.eq.s32.totalorder %s18, 0
      %p39 = por %p37, %p38
      %p40 = scmp.ne.s32.totalorder %s26, %s27
      %p41 = scmp.eq.s32.totalorder %s19, 1
      %p42 = por %p40, %p41
      %p44 = scmp.ne.s32.totalorder %s27, %s43
      %p45 = scmp.eq.s32.totalorder %s19, 0
      %p46 = por %p44, %p45
      %s47 = ssub.s32 %s13, %s20
      %p48 = scmp.eq.s32.totalorder %s47, 0
      %s50 = sadd.s32 %s49, 1
      %s51 = scalar_select %p48, %s49, %s50
      %p54 = pneg %p48
      %p55 = scmp.eq.s32.totalorder %s13, 1
      %p56 = por %p54, %p55
      %p57 = scmp.ne.s32.totalorder %s49, %s52
      %p58 = scmp.eq.s32.totalorder %s13, 0
      %p59 = por %p57, %p58
      %p60 = scmp.ne.s32.totalorder %s49, %s52
      %p61 = scmp.eq.s32.totalorder %s18, 1
      %p62 = por %p60, %p61
      %p63 = scmp.ne.s32.totalorder %s52, %s53
      %p64 = scmp.eq.s32.totalorder %s18, 0
      %p65 = por %p63, %p64
      %p66 = scmp.ne.s32.totalorder %s52, %s53
      %p67 = scmp.eq.s32.totalorder %s19, 1
      %p68 = por %p66, %p67
      %p70 = scmp.ne.s32.totalorder %s53, %s69
      %p71 = scmp.eq.s32.totalorder %s19, 0
      %p72 = por %p70, %p71
      %p73 = scmp.le.s32.totalorder 1, %s13
      %p74 = scmp.lt.s32.totalorder %s13, 3
      %p75 = pnand %p73, %p74
      %p76 = pneg %p75
      // Predicated region
      $region9: #{tpu_custom_call.1} parent=5 // pred_check
        _
      $region10: #{tpu_custom_call.1} parent=5 // pred_check_branch
        %78 = sbr.rel (%p75) target = $region12
      $region11: #{tpu_custom_call.1} parent=5 // pred_region
        %s79 = ssub.s32 %s13, 1
      $region12: #{tpu_custom_call.1} parent=5 // pred_fallthru
        _
      %p80 = scmp.lt.s32.totalorder %s13, 2
      // Predicated region
      $region13: #{tpu_custom_call.1} parent=5 // pred_check
        %p81 = pneg %p80
      $region14: #{tpu_custom_call.1} parent=5 // pred_check_branch
        %83 = sbr.rel (%p81) target = $region16
      $region15: #{tpu_custom_call.1} parent=5 // pred_region
        // Predicated region
        $region17: #{tpu_custom_call.1} parent=15 // pred_check
          %p84 = pneg %p33
        $region18: #{tpu_custom_call.1} parent=15 // pred_check_branch
          %86 = sbr.rel (%p84) target = $region20
        $region19: #{tpu_custom_call.1} parent=15 // pred_region
          %s87 = sand.u32 %s23, 1
          %s88 = scalar_lea.sflag [#allocation3], %s87
          %s89 = sand.u32 %s23, 1
          %s90 = smul.addr %s89, 16
          %s91 = scalar_lea.vmem [#allocation2], %s90
          %s93 = ssub.s32 256, 256
          %94 = vsyncadd %s88, %s93
          %s95 = smul.addr %s13, 2
          %s96 = smul.addr %s95, 128
          %s97 = scalar_lea.hbm %s0, %s96
          %s98 = sshll.u32 %s91, 4
          %s99 = int_to_ptr.vmem [resolvable:$true] %s98
          %104 = dma.hbm_to_vmem [thread:$0]  %s97, 256, %s99, %s88, 128, 128, 8
        $region20: #{tpu_custom_call.1} parent=15 // pred_fallthru
          _
      $region16: #{tpu_custom_call.1} parent=5 // pred_fallthru
        _
      %p105 = scmp.le.s32.totalorder 1, %s13
      %p106 = scmp.lt.s32.totalorder %s13, 3
      %p107 = pnand %p105, %p106
      %p108 = pneg %p107
      // Predicated region
      $region21: #{tpu_custom_call.1} parent=5 // pred_check
        _
      $region22: #{tpu_custom_call.1} parent=5 // pred_check_branch
        %110 = sbr.rel (%p107) target = $region24
      $region23: #{tpu_custom_call.1} parent=5 // pred_region
        %s111 = ssub.s32 %s13, 1
        %s112 = sand.u32 %s26, 1
        %s113 = scalar_lea.sflag [#allocation3], %s112
        %s114 = sand.u32 %s26, 1
        %s115 = smul.addr %s114, 16
        %s116 = scalar_lea.vmem [#allocation2], %s115
        // Predicated region
        $region25: #{tpu_custom_call.1} parent=23 // pred_check
          %p117 = pneg %p39
        $region26: #{tpu_custom_call.1} parent=23 // pred_check_branch
          %119 = sbr.rel (%p117) target = $region28
        $region27: #{tpu_custom_call.1} parent=23 // pred_region
          %120 = dma.done %s113, 256
        $region28: #{tpu_custom_call.1} parent=23 // pred_fallthru
          _
        %s121 = sand.u32 %s26, 1
        %s122 = scalar_lea.sflag [#allocation3], %s121
        %s123 = sand.u32 %s26, 1
        %s124 = smul.addr %s123, 16
        %s125 = scalar_lea.vmem [#allocation2], %s124
        %p126 = pneg %p39
        %p127 = pneg %p36
        %p128 = pneg %p65
        %p129 = pneg %p62
        %s130 = sand.u32 %s52, 1
        %s131 = scalar_lea.sflag [#allocation4], %s130
        %s132 = sand.u32 %s52, 1
        %s133 = smul.addr %s132, 48
        %s134 = scalar_lea.vmem [#allocation5], %s133
        %v135 = vld [vmem:[%s116] sm:$0xff]
        %v136 = vld [vmem:[%s116 + $0x8] sm:$0xff]
        %v137 = vlaneseq
        %v138 = vshrl.u32 %v137, 7
        %v139 = vadd.s32 %v138, 8
        %v140 = vlaneseq
        %v141 = vand.u32 %v140, 127
        %vm142 = vcmp.ne.s32.totalorder %v138, %v141
        %vm143 = vcmp.ne.s32.totalorder %v139, %v141
        %v144 = vsel %vm142, %v135, 0.0
        %v145 = vsel %vm143, %v136, 0.0
        %vm146 = vcmask 130048
        %147 = vst.msk [vmem:[%s134] sm:$0xff] %vm146, %v144
        %148 = vst.msk [vmem:[%s134 + $0x8] sm:$0xff] %vm146, %v145
        %v150 = vsel %vm146, %v135, 0
        %v153 = vsel %vm146, %v136, 0
        %155 = vmatprep.subr.mxu0 0.0
        %156 = vmatpush1.msra.mxu0 %v135
        %157 = vmatprep.subr.mxu0 0.0
        %158 = vmatpush1.msra.mxu0 %v136
        %159 = vmatprep.subr.mxu0 0.0
        %160 = vmatpush1.msra.mxu0 0.0
        %161 = vmatprep.subr.mxu0 0.0
        %162 = vmatpush1.msra.mxu0 0.0
        %163 = vmatprep.subr.mxu0 0.0
        %164 = vmatpush1.msra.mxu0 0.0
        %165 = vmatprep.subr.mxu0 0.0
        %166 = vmatpush1.msra.mxu0 0.0
        %167 = vmatprep.subr.mxu0 0.0
        %168 = vmatpush1.msra.mxu0 0.0
        %169 = vmatprep.subr.mxu0 0.0
        %170 = vmatpush1.msra.mxu0 0.0
        %171 = vmatprep.subr.mxu0 0.0
        %172 = vmatpush1.msra.mxu0 0.0
        %173 = vmatprep.subr.mxu0 0.0
        %174 = vmatpush1.msra.mxu0 0.0
        %175 = vmatprep.subr.mxu0 0.0
        %176 = vmatpush1.msra.mxu0 0.0
        %177 = vmatprep.subr.mxu0 0.0
        %178 = vmatpush1.msra.mxu0 0.0
        %179 = vmatprep.subr.mxu0 0.0
        %180 = vmatpush1.msra.mxu0 0.0
        %181 = vmatprep.subr.mxu0 0.0
        %182 = vmatpush1.msra.mxu0 0.0
        %183 = vmatprep.subr.mxu0 0.0
        %184 = vmatpush1.msra.mxu0 0.0
        %185 = vmatprep.subr.mxu0 0.0
        %186 = vmatpush1.msra.mxu0 0.0
        %187 = vmatprep.subr.mxu0 0.0
        %188 = vmatpush1.msra.mxu0 0.0
        %189 = vmatprep.subr.mxu0 0.0
        %190 = vmatpush1.msra.mxu0 0.0
        %191 = vmatprep.subr.mxu0 0.0
        %192 = vmatpush1.msra.mxu0 0.0
        %193 = vmatprep.subr.mxu0 0.0
        %194 = vmatpush1.msra.mxu0 0.0
        %195 = vmatprep.subr.mxu0 0.0
        %196 = vmatpush1.msra.mxu0 0.0
        %197 = vmatprep.subr.mxu0 0.0
        %198 = vmatpush1.msra.mxu0 0.0
        %199 = vmatprep.subr.mxu0 0.0
        %200 = vmatpush1.msra.mxu0 0.0
        %201 = vmatprep.subr.mxu0 0.0
        %202 = vmatpush1.msra.mxu0 0.0
        %203 = vmatprep.subr.mxu0 0.0
        %204 = vmatpush1.msra.mxu0 0.0
        %205 = vmatprep.subr.mxu0 0.0
        %206 = vmatpush1.msra.mxu0 0.0
        %207 = vmatprep.subr.mxu0 0.0
        %208 = vmatpush1.msra.mxu0 0.0
        %209 = vmatprep.subr.mxu0 0.0
        %210 = vmatpush1.msra.mxu0 0.0
        %211 = vmatprep.subr.mxu0 0.0
        %212 = vmatpush1.msra.mxu0 0.0
        %213 = vmatprep.subr.mxu0 0.0
        %214 = vmatpush1.msra.mxu0 0.0
        %215 = vmatprep.subr.mxu0 0.0
        %216 = vmatpush1.msra.mxu0 0.0
        %217 = vmatprep.subr.mxu0 0.0
        %218 = vmatpush1.msra.mxu0 0.0
        %219 = vmatprep.mubr.f32.mxu0 0.0
        %220 = vmatmul.mubr.f32.gmra.mrb[0].mxu0 %v150
        %v221 = vpop.f32.mrb[0].mxu0
        %v222 = vadd.f32 0.0, %v221
        %v223 = vpop.f32.mrb[0].mxu0
        %224 = vmatprep.mubr.f32.mxu0 0.0
        %225 = vmatmul.mubr.f32.gmra.mrb[0].mxu0 %v153
        %v226 = vpop.f32.mrb[0].mxu0
        %v227 = vadd.f32 0.0, %v226
        %v228 = vpop.f32.mrb[0].mxu0
        %229 = vdwg.mxu0
        %v230 = vsel %vm142, %v222, 0.0
        %v231 = vsel %vm143, %v227, 0.0
        %s232 = scalar_lea.vmem %s134, 16 [#allocation5]
        %233 = vst.msk [vmem:[%s232] sm:$0xff] %vm146, %v230
        %234 = vst.msk [vmem:[%s232 + $0x8] sm:$0xff] %vm146, %v231
        %v236 = vsel %vm146, %v222, 0
        %v239 = vsel %vm146, %v227, 0
        %241 = vmatprep.subr.mxu0 0.0
        %242 = vmatpush1.msra.mxu0 %v135
        %243 = vmatprep.subr.mxu0 0.0
        %244 = vmatpush1.msra.mxu0 %v136
        %245 = vmatprep.subr.mxu0 0.0
        %246 = vmatpush1.msra.mxu0 0.0
        %247 = vmatprep.subr.mxu0 0.0
        %248 = vmatpush1.msra.mxu0 0.0
        %249 = vmatprep.subr.mxu0 0.0
        %250 = vmatpush1.msra.mxu0 0.0
        %251 = vmatprep.subr.mxu0 0.0
        %252 = vmatpush1.msra.mxu0 0.0
        %253 = vmatprep.subr.mxu0 0.0
        %254 = vmatpush1.msra.mxu0 0.0
        %255 = vmatprep.subr.mxu0 0.0
        %256 = vmatpush1.msra.mxu0 0.0
        %257 = vmatprep.subr.mxu0 0.0
        %258 = vmatpush1.msra.mxu0 0.0
        %259 = vmatprep.subr.mxu0 0.0
        %260 = vmatpush1.msra.mxu0 0.0
        %261 = vmatprep.subr.mxu0 0.0
        %262 = vmatpush1.msra.mxu0 0.0
        %263 = vmatprep.subr.mxu0 0.0
        %264 = vmatpush1.msra.mxu0 0.0
        %265 = vmatprep.subr.mxu0 0.0
        %266 = vmatpush1.msra.mxu0 0.0
        %267 = vmatprep.subr.mxu0 0.0
        %268 = vmatpush1.msra.mxu0 0.0
        %269 = vmatprep.subr.mxu0 0.0
        %270 = vmatpush1.msra.mxu0 0.0
        %271 = vmatprep.subr.mxu0 0.0
        %272 = vmatpush1.msra.mxu0 0.0
        %273 = vmatprep.subr.mxu0 0.0
        %274 = vmatpush1.msra.mxu0 0.0
        %275 = vmatprep.subr.mxu0 0.0
        %276 = vmatpush1.msra.mxu0 0.0
        %277 = vmatprep.subr.mxu0 0.0
        %278 = vmatpush1.msra.mxu0 0.0
        %279 = vmatprep.subr.mxu0 0.0
        %280 = vmatpush1.msra.mxu0 0.0
        %281 = vmatprep.subr.mxu0 0.0
        %282 = vmatpush1.msra.mxu0 0.0
        %283 = vmatprep.subr.mxu0 0.0
        %284 = vmatpush1.msra.mxu0 0.0
        %285 = vmatprep.subr.mxu0 0.0
        %286 = vmatpush1.msra.mxu0 0.0
        %287 = vmatprep.subr.mxu0 0.0
        %288 = vmatpush1.msra.mxu0 0.0
        %289 = vmatprep.subr.mxu0 0.0
        %290 = vmatpush1.msra.mxu0 0.0
        %291 = vmatprep.subr.mxu0 0.0
        %292 = vmatpush1.msra.mxu0 0.0
        %293 = vmatprep.subr.mxu0 0.0
        %294 = vmatpush1.msra.mxu0 0.0
        %295 = vmatprep.subr.mxu0 0.0
        %296 = vmatpush1.msra.mxu0 0.0
        %297 = vmatprep.subr.mxu0 0.0
        %298 = vmatpush1.msra.mxu0 0.0
        %299 = vmatprep.subr.mxu0 0.0
        %300 = vmatpush1.msra.mxu0 0.0
        %301 = vmatprep.subr.mxu0 0.0
        %302 = vmatpush1.msra.mxu0 0.0
        %303 = vmatprep.subr.mxu0 0.0
        %304 = vmatpush1.msra.mxu0 0.0
        %305 = vmatprep.mubr.f32.mxu0 0.0
        %306 = vmatmul.mubr.f32.gmra.mrb[0].mxu0 %v236
        %v307 = vpop.f32.mrb[0].mxu0
        %v308 = vadd.f32 0.0, %v307
        %v309 = vpop.f32.mrb[0].mxu0
        %310 = vmatprep.mubr.f32.mxu0 0.0
        %311 = vmatmul.mubr.f32.gmra.mrb[0].mxu0 %v239
        %v312 = vpop.f32.mrb[0].mxu0
        %v313 = vadd.f32 0.0, %v312
        %v314 = vpop.f32.mrb[0].mxu0
        %315 = vdwg.mxu0
        %v316 = vsel %vm142, %v308, 0.0
        %v317 = vsel %vm143, %v313, 0.0
        %s318 = scalar_lea.vmem %s134, 32 [#allocation5]
        %319 = vst.msk [vmem:[%s318] sm:$0xff] %vm146, %v316
        %320 = vst.msk [vmem:[%s318 + $0x8] sm:$0xff] %vm146, %v317
        %s321 = sand.u32 %s52, 1
        %s322 = scalar_lea.sflag [#allocation4], %s321
        %s323 = sand.u32 %s52, 1
        %s324 = smul.addr %s323, 48
        %s325 = scalar_lea.vmem [#allocation5], %s324
        // Predicated region
        $region29: #{tpu_custom_call.1} parent=23 // pred_check
          %p326 = pneg %p62
        $region30: #{tpu_custom_call.1} parent=23 // pred_check_branch
          %328 = sbr.rel (%p326) target = $region32
        $region31: #{tpu_custom_call.1} parent=23 // pred_region
          %s330 = ssub.s32 768, 768
          %331 = vsyncadd %s322, %s330
          %s332 = smul.addr %s18, 6
          %s333 = smul.addr %s332, 128
          %s334 = scalar_lea.hbm %s1, %s333
          %s335 = sshll.u32 %s325, 4
          %s336 = int_to_ptr.vmem [resolvable:$true] %s335
          %341 = dma.vmem_to_hbm [thread:$0]  %s336, 768, %s334, %s322, 128, 128, 8
        $region32: #{tpu_custom_call.1} parent=23 // pred_fallthru
          _
      $region24: #{tpu_custom_call.1} parent=5 // pred_fallthru
        _
      %p342 = scmp.le.s32.totalorder 2, %s13
      // Predicated region
      $region33: #{tpu_custom_call.1} parent=5 // pred_check
        %p343 = pneg %p342
      $region34: #{tpu_custom_call.1} parent=5 // pred_check_branch
        %345 = sbr.rel (%p343) target = $region36
      $region35: #{tpu_custom_call.1} parent=5 // pred_region
        %s346 = ssub.s32 %s13, 2
        // Predicated region
        $region37: #{tpu_custom_call.1} parent=35 // pred_check
          %p347 = pneg %p68
        $region38: #{tpu_custom_call.1} parent=35 // pred_check_branch
          %349 = sbr.rel (%p347) target = $region40
        $region39: #{tpu_custom_call.1} parent=35 // pred_region
          %s350 = sand.u32 %s53, 1
          %s351 = scalar_lea.sflag [#allocation4], %s350
          %s352 = sand.u32 %s53, 1
          %s353 = smul.addr %s352, 48
          %s354 = scalar_lea.vmem [#allocation5], %s353
          %355 = dma.done %s351, 768
        $region40: #{tpu_custom_call.1} parent=35 // pred_fallthru
          _
      $region36: #{tpu_custom_call.1} parent=5 // pred_fallthru
        _
    $region6: #{tpu_custom_call.1} parent=1 // loop_footer
      %s17 = sadd.s32 1, %s13
    $region7: #{tpu_custom_call.1} parent=1 // loop_footer_branch
      %12 = sbr.rel target = $region3
    $region8: #{tpu_custom_call.1} parent=1 // loop_exit
      _
    %356 = vsyncpa [#allocation3], 1
    %s357 = scalar_lea.sflag [#allocation3], 1
    %358 = vsyncpa %s357, 1
    %359 = vsyncpa [#allocation4], 1
    %s360 = scalar_lea.sflag [#allocation4], 1
    %361 = vsyncpa %s360, 1

</llo_original>
